<compile_context>
chip_gen: v5e
topology: v5e:2x2
jax: 0.10.0
libtpu: 0.0.40
codegen_flags: <defaults>
</compile_context>

<pallas_src>
import functools

import jax
import jax.numpy as jnp
from jax.experimental import pallas as pl
from jax.experimental.pallas import tpu as pltpu

_LANE = 128


def _safe_log_kernel(x_ref, o_ref, *, clip_val):
    x = x_ref[...]
    # torch.clip(x, min=clip_val) == maximum(x, clip_val); NaN propagation
    # matches torch semantics (NaN stays NaN through maximum and log).
    clipped = jnp.maximum(x, jnp.asarray(clip_val, dtype=x.dtype))
    o_ref[...] = jnp.log(clipped)


def safe_log(x, clip_val: float = 1e-7, *, target_block_bytes: int = 2 * 1024 * 1024):
    """Elementwise log(clip(x, min=clip_val)) via a lane-dense Pallas TPU kernel."""
    orig_shape = x.shape
    n = x.size
    if n == 0:
        return x

    itemsize = jnp.dtype(x.dtype).itemsize

    # Flatten fully to 1D, then view as a lane-dense 2D slab.
    flat = x.reshape(-1)
    pad = (-n) % _LANE
    if pad:
        # Tail padding only (< 128 elements); padded values are discarded below.
        flat = jnp.pad(flat, (0, pad), constant_values=1)
    n_pad = n + pad

    # Widest lane-dense column count that still leaves >= 8 rows (full sublane
    # usage). 128 always divides n_pad after the tail pad, so cols >= 128.
    cols = _LANE
    for c in (4096, 2048, 1024, 512, 256):
        if n_pad % c == 0 and n_pad // c >= 8:
            cols = c
            break
    rows = n_pad // cols
    x2 = flat.reshape(rows, cols)

    # Byte-capped row tiling: ~target_block_bytes per block. Input + output are
    # each double-buffered (~4x block bytes resident), so 2 MiB blocks stay well
    # inside every generation's scoped-VMEM default (v5e 16 MiB, v6e/v7x 32 MiB).
    sublane = max(8, 32 // itemsize)  # 8 for f32, 16 for bf16, 32 for int8
    max_rows = max(sublane, (target_block_bytes // (cols * itemsize)) // sublane * sublane)
    if rows <= max_rows:
        tile_rows = rows      # single block; full-dim block shape is always legal
    else:
        tile_rows = max_rows  # multiple of sublane tile; cols multiple of 128
    grid = (pl.cdiv(rows, tile_rows),)  # ragged last block handled by Pallas

    kernel = functools.partial(_safe_log_kernel, clip_val=clip_val)
    out = pl.pallas_call(
        kernel,
        out_shape=jax.ShapeDtypeStruct((rows, cols), x.dtype),
        grid_spec=pl.GridSpec(
            grid=grid,
            in_specs=[pl.BlockSpec((tile_rows, cols), lambda i: (i, 0))],
            out_specs=pl.BlockSpec((tile_rows, cols), lambda i: (i, 0)),
        ),
        compiler_params=pltpu.CompilerParams(
            dimension_semantics=("parallel",),  # v7x: shard grid over both TCs
        ),
    )(x2)

    flat_out = out.reshape(-1)
    if pad:
        flat_out = flat_out[:n]
    return flat_out.reshape(orig_shape)


if __name__ == "__main__":
    key = jax.random.PRNGKey(0)
    # Small NCHW-like input consistent with feature-extractor usage.
    x = jax.random.uniform(key, (2, 4, 16, 16), dtype=jnp.float32, minval=0.0, maxval=2.0)
    # Inject tiny / zero values to exercise the clip path.
    x = x.at[0, 0, 0, :4].set(jnp.array([0.0, 1e-12, 1e-7, 1e-3], dtype=jnp.float32))

    y = jax.block_until_ready(safe_log(x, clip_val=1e-7))
    ref = jnp.log(jnp.maximum(x, 1e-7))
    assert y.shape == x.shape and y.dtype == x.dtype
    assert jnp.allclose(y, ref, atol=1e-6, rtol=1e-6)

    # Exercise the lane-unfriendly (tail-padded) path as well.
    x2 = jax.random.uniform(jax.random.PRNGKey(1), (3, 5, 7), dtype=jnp.float32,
                            minval=0.0, maxval=2.0)
    y2 = jax.block_until_ready(safe_log(x2))
    ref2 = jnp.log(jnp.maximum(x2, 1e-7))
    assert y2.shape == x2.shape and jnp.allclose(y2, ref2, atol=1e-6, rtol=1e-6)

    print("KERNEL_OK")
</pallas_src>

<mosaic_0001>
module attributes {stable_mosaic.version = 11 : i64} {
  func.func @_safe_log_kernel(%arg0: i32, %arg1: memref<8x256xf32, #tpu.memory_space<vmem>>, %arg2: memref<8x256xf32, #tpu.memory_space<vmem>>) attributes {dimension_semantics = [#tpu.dimension_semantics<parallel>], iteration_bounds = array<i64: 1>, scalar_prefetch = 0 : i64, scratch_operands = 0 : i64, tpu.core_type = #tpu.core_type<tc>, window_params = [{transform_indices = @transform_0, window_bounds = array<i64: 8, 256>}, {transform_indices = @transform_1, window_bounds = array<i64: 8, 256>}]} {
    %c0 = arith.constant 0 : index
    %c0_0 = arith.constant 0 : index
    %0 = vector.load %arg1[%c0, %c0_0] : memref<8x256xf32, #tpu.memory_space<vmem>>, vector<8x256xf32>
    %cst = arith.constant 1.000000e-07 : f32
    %1 = vector.broadcast %cst : f32 to vector<8x256xf32>
    %2 = arith.maximumf %0, %1 : vector<8x256xf32>
    %3 = math.log %2 : vector<8x256xf32>
    %c0_1 = arith.constant 0 : index
    %c0_2 = arith.constant 0 : index
    %4 = vector.load %arg2[%c0_1, %c0_2] : memref<8x256xf32, #tpu.memory_space<vmem>>, vector<8x256xf32>
    tpu.vector_store %arg2[%c0_1, %c0_2], %3 {strides = array<i32>} : memref<8x256xf32, #tpu.memory_space<vmem>>, vector<8x256xf32>,
    return
  }
  func.func @transform_0(%arg0: i32) -> (i32, i32) {
    %c0_i32 = arith.constant 0 : i32
    %c0_i32_0 = arith.constant 0 : i32
    return %arg0, %c0_i32 : i32, i32
  }
  func.func @transform_1(%arg0: i32) -> (i32, i32) {
    %c0_i32 = arith.constant 0 : i32
    %c0_i32_0 = arith.constant 0 : i32
    return %arg0, %c0_i32 : i32, i32
  }
}

</mosaic_0001>

<llo_original>
// kernel: tpu_custom_call.1
$region0: #{tpu_custom_call.1}
  #allocation0 [shape = 'u32[]', space=smem, size = 0x4, offset = 0x4, fixed_abs, tag = 'smem constant byte address 0x4 - core index']
  #allocation1 [shape = 'u32[72,128]{1,0:T(1,128)}', space=vmem, size = 0x9000, scoped, tag = 'internal scratch']
  %s0 = inlined_call_operand.hbm [shape: f32[8,256], index: 0, kind: input, shape index: {}]
  %s1 = inlined_call_operand.hbm [shape: f32[8,256], index: 1, kind: output, shape index: {}]
  %s2 = sld [smem:[#allocation0]]
  $region18: #{tpu_custom_call.1} parent=0
    _
  %s4 = ssub.s32 1, %s2
  %s5 = scalar_select 0, %s4, %s2
  $region1: #{tpu_custom_call.1} parent=0
    #allocation2 [shape = 'u8[8192]{0}', space=vmem, size = 0x2000, scoped, tag = 'input window, operand 0, single buffered']
    #allocation3 [shape = 's32[1]{0}', space=sflag, size = 0x4, scoped, tag = 'scoped memory for tpu_custom_call.1']
    #allocation4 [shape = 's32[1]{0}', space=sflag, size = 0x4, scoped, tag = 'scoped memory for tpu_custom_call.1']
    #allocation5 [shape = 'u8[8192]{0}', space=vmem, size = 0x2000, scoped, tag = 'output window, operand 0, single buffered']
    %6 = vsyncpa [#allocation3], 0
    %7 = vsyncpa [#allocation4], 0
    // Predicated region
    $region2: #{tpu_custom_call.1} parent=1 // pred_check
      _
    $region3: #{tpu_custom_call.1} parent=1 // pred_check_branch
      %9 = sbr.rel (0) target = $region5
    $region4: #{tpu_custom_call.1} parent=1 // pred_region
      %11 = vsyncadd [#allocation3], 0
      %s13 = sshll.u32 %s0, 4
      %s14 = int_to_ptr.hbm [resolvable:$true] %s13
      %s15 = sshll.u32 [#allocation2], 4
      %s16 = int_to_ptr.vmem [resolvable:$true] %s15
      %18 = dma.hbm_to_vmem [thread:$0]  %s14, 256, %s16, [#allocation3]
    $region5: #{tpu_custom_call.1} parent=1 // pred_fallthru
      _
    // Predicated region
    $region6: #{tpu_custom_call.1} parent=1 // pred_check
      _
    $region7: #{tpu_custom_call.1} parent=1 // pred_check_branch
      %20 = sbr.rel (0) target = $region9
    $region8: #{tpu_custom_call.1} parent=1 // pred_region
      %22 = dma.done [#allocation3], 256
    $region9: #{tpu_custom_call.1} parent=1 // pred_fallthru
      _
    %v23 = vld [vmem:[#allocation2] sm:$0xff]
    %v24 = vld [vmem:[#allocation2 + $0x8] sm:$0xff]
    %v25 = vmax.f32 %v23, 1e-07
    %v26 = vmax.f32 %v24, 1e-07
    %v27 = vlog2.pop %v25
    %v28 = vmul.f32 %v27, 0.6931472
    %v29 = vlog2.pop %v26
    %v30 = vmul.f32 %v29, 0.6931472
    %31 = vst [vmem:[#allocation5] sm:$0xff] %v28
    %32 = vst [vmem:[#allocation5 + $0x8] sm:$0xff] %v30
    // Predicated region
    $region10: #{tpu_custom_call.1} parent=1 // pred_check
      _
    $region11: #{tpu_custom_call.1} parent=1 // pred_check_branch
      %34 = sbr.rel (0) target = $region13
    $region12: #{tpu_custom_call.1} parent=1 // pred_region
      %36 = vsyncadd [#allocation4], 0
      %s38 = sshll.u32 [#allocation5], 4
      %s39 = int_to_ptr.vmem [resolvable:$true] %s38
      %s40 = sshll.u32 %s1, 4
      %s41 = int_to_ptr.hbm [resolvable:$true] %s40
      %43 = dma.vmem_to_hbm [thread:$0]  %s39, 256, %s41, [#allocation4]
    $region13: #{tpu_custom_call.1} parent=1 // pred_fallthru
      _
    // Predicated region
    $region14: #{tpu_custom_call.1} parent=1 // pred_check
      _
    $region15: #{tpu_custom_call.1} parent=1 // pred_check_branch
      %45 = sbr.rel (0) target = $region17
    $region16: #{tpu_custom_call.1} parent=1 // pred_region
      %47 = dma.done [#allocation4], 256
    $region17: #{tpu_custom_call.1} parent=1 // pred_fallthru
      _
    %48 = vsyncpa [#allocation3], 1
    %49 = vsyncpa [#allocation4], 1

</llo_original>
